<compile_context>
chip_gen: v5e
topology: v5e:2x2
jax: 0.10.0
libtpu: 0.0.40
codegen_flags: <defaults>
</compile_context>

<pallas_src>
import jax
import jax.numpy as jnp
from jax.experimental import pallas as pl
from jax.experimental.pallas import tpu as pltpu


def _hbm_copy_kernel(x_hbm, o_hbm, sem):
    # Single whole-tensor HBM->HBM DMA: no VMEM round trip, no blocked grid,
    # no vld/vst work on the TensorCore.
    cp = pltpu.make_async_copy(x_hbm, o_hbm, sem)
    cp.start()
    cp.wait()


def _forced_copy(x_flat):
    """Materialize a fresh copy of `x_flat` via one HBM->HBM DMA."""
    nbytes = x_flat.size * jnp.dtype(x_flat.dtype).itemsize
    return pl.pallas_call(
        _hbm_copy_kernel,
        out_shape=jax.ShapeDtypeStruct(x_flat.shape, x_flat.dtype),
        in_specs=[pl.BlockSpec(memory_space=pl.ANY)],
        out_specs=pl.BlockSpec(memory_space=pl.ANY),
        scratch_shapes=[pltpu.SemaphoreType.DMA(())],
        # Pure-DMA op: advise XLA's scheduler so it can overlap neighbours.
        cost_estimate=pl.CostEstimate(
            flops=0,
            transcendentals=0,
            bytes_accessed=2 * nbytes,
        ),
    )(x_flat)


def pallas_reshape(x, *shape, force_copy=False):
    """Equivalent of torch Reshape(*shape).forward(x): x.reshape(x.shape[0], *shape).

    Default: metadata-only reshape (optimal; what XLA would compile anyway).
    force_copy=True: additionally materialize a fresh buffer with a single
    HBM->HBM DMA Pallas kernel.
    """
    B = x.shape[0]
    total = x.size
    tgt = 1
    for s in shape:
        tgt *= s
    assert B * tgt == total, f"cannot reshape {x.shape} -> ({B}, {shape})"

    out_shape = (B, *shape)
    # Metadata-only glue: view the buffer at the target shape.
    y = jnp.reshape(x, out_shape)

    if not force_copy:
        # Optimal path: reshape of a contiguous buffer is free.
        return y

    # Explicitly requested fresh buffer: one whole-tensor HBM->HBM DMA.
    return _forced_copy(y)


if __name__ == "__main__":
    key = jax.random.PRNGKey(0)
    # Small NCHW input consistent with a conv-net usage of Reshape.
    B, C, H, W = 2, 4, 16, 16
    x = jax.random.normal(key, (B, C, H, W), dtype=jnp.float32)

    # Module instance semantics: Reshape(C, H * W) -> x.reshape(B, C, H*W)
    target_shape = (C, H * W)
    ref = jnp.reshape(x, (B, *target_shape))

    # Default (optimal, metadata-only) path.
    out_fast = pallas_reshape(x, *target_shape)
    out_fast = jax.block_until_ready(out_fast)
    assert out_fast.shape == (B, C, H * W)
    assert out_fast.dtype == x.dtype
    assert bool(jnp.all(out_fast == ref))

    # Forced-copy path: exercises the Pallas HBM->HBM DMA kernel once.
    out_copy = pallas_reshape(x, *target_shape, force_copy=True)
    out_copy = jax.block_until_ready(out_copy)
    assert out_copy.shape == (B, C, H * W)
    assert out_copy.dtype == x.dtype
    assert bool(jnp.all(out_copy == ref))

    print("KERNEL_OK")
</pallas_src>

<mosaic_0001>
module attributes {stable_mosaic.version = 11 : i64} {
  func.func @_hbm_copy_kernel(%arg0: memref<2x4x256xf32, #tpu.memory_space<any>>, %arg1: memref<2x4x256xf32, #tpu.memory_space<any>>, %arg2: memref<!tpu.dma_semaphore, #tpu.memory_space<semaphore_mem>>) attributes {dimension_semantics = [], scalar_prefetch = 0 : i64, scratch_operands = 1 : i64, tpu.core_type = #tpu.core_type<tc>} {
    tpu.enqueue_dma source(%arg0 : memref<2x4x256xf32, #tpu.memory_space<any>>) target(%arg1 : memref<2x4x256xf32, #tpu.memory_space<any>>) target_semaphore(%arg2 : memref<!tpu.dma_semaphore, #tpu.memory_space<semaphore_mem>>)
    tpu.wait_dma2 semaphore(%arg2 : memref<!tpu.dma_semaphore, #tpu.memory_space<semaphore_mem>>) src(%arg0 : memref<2x4x256xf32, #tpu.memory_space<any>>) dst(%arg1 : memref<2x4x256xf32, #tpu.memory_space<any>>)
    return
  }
}

</mosaic_0001>

<llo_original>
// kernel: tpu_custom_call.1
$region0: #{tpu_custom_call.1}
  #allocation0 [shape = 'u32[]', space=smem, size = 0x4, offset = 0x4, fixed_abs, tag = 'smem constant byte address 0x4 - core index']
  #allocation1 [shape = 'u32[72,128]{1,0:T(1,128)}', space=vmem, size = 0x9000, scoped, tag = 'internal scratch']
  #allocation2 [shape = 's32[1]{0}', space=sflag, size = 0x4, scoped, tag = 'scratch operand']
  #allocation3 [shape = 's32[]', space=sflag, size = 0x4, offset = 0, fixed_abs, tag = 'sflag constant byte address 0x0 - dummy sync flag']
  #allocation4 [shape = 'u32[0]{0}', space=smem, size = 0, offset = 0, fixed_abs, tag = 'smem constant byte address 0x0 - null']
  %s0 = inlined_call_operand.hbm [shape: f32[2,4,256], index: 0, kind: input, shape index: {}]
  %s1 = inlined_call_operand.hbm [shape: f32[2,4,256], index: 1, kind: output, shape index: {}]
  %s2 = sld [smem:[#allocation0]]
  $region2: #{tpu_custom_call.1} parent=0
    _
  %s4 = ssub.s32 1, %s2
  %s5 = scalar_select 0, %s4, %s2
  %s7 = sshll.u32 1, 14
  %s8 = sxor.u32 4294967295, %s7
  %s10 = sshll.u32 %s0, 4
  %s11 = int_to_ptr.hbm [resolvable:$true] %s10
  %s12 = sshll.u32 %s1, 4
  %s13 = int_to_ptr.hbm [resolvable:$true] %s12
  %16 = dma.general %s11, 256, %s13, [#allocation2], [#allocation3], [#allocation4], 0, 0
  %s17 = smul.u32 4, 2
  %s18 = smul.u32 %s17, 1
  %s19 = smul.u32 %s18, 2
  %s20 = sshll.u32 %s19, 4
  %21 = dma.done [#allocation2], %s20
  %22 = vsyncmov [#allocation2]
  %s23 = vpop.sfrf %22
  %p24 = scmp.eq.s32.totalorder %s23, 0
  %p25 = pneg %p24
  %27 = shalt.err (%p25)

</llo_original>
